<compile_context>
chip_gen: v5e
topology: v5e:2x2
jax: 0.10.0
libtpu: 0.0.40
codegen_flags: <defaults>
</compile_context>

<pallas_src>
import jax
import jax.numpy as jnp
from jax.experimental import pallas as pl
from jax.experimental.pallas import tpu as pltpu


def _round_up(x, m):
    return ((x + m - 1) // m) * m


def _choose_row_tile(n, max_tile=512):
    """N-aware row tile: multiple of 8, minimal padding, even step count when free."""
    n8 = _round_up(max(n, 1), 8)
    if n8 <= max_tile:
        # Split into 2 even tiles (keeps both v7x TensorCores busy) only when it
        # costs no extra row padding and each tile still feeds the MXU well.
        if n8 >= 256 and n8 % 16 == 0:
            return n8 // 2
        return n8
    num_tiles = -(-n8 // max_tile)
    num_tiles += num_tiles % 2  # even grid-step count -> v7x megacore split
    return _round_up(-(-n8 // num_tiles), 8)


def _vmem_limit_bytes():
    """Generation-aware scoped-VMEM limit (~3/4 of physical, capped)."""
    try:
        cap = getattr(pltpu.get_tpu_info(), "vmem_capacity_bytes", None)
        if cap:
            return int(min(cap * 3 // 4, 100 * 1024 * 1024))
    except Exception:
        pass
    return 48 * 1024 * 1024  # safe on v7x (64 MiB physical) and below


def _make_fused_encoder_kernel(num_layer):
    """One row-tile of the whole encoder: GNN-stack stand-in + PEG stand-in."""

    def kernel(*refs):
        # refs = (x, pe, w0, b0, ..., w{L-1}, b{L-1}, wpe, bpe, h_out, pe_out)
        x_ref, pe_ref = refs[0], refs[1]
        layer_refs = refs[2:2 + 2 * num_layer]
        wpe_ref, bpe_ref = refs[2 + 2 * num_layer], refs[3 + 2 * num_layer]
        h_out_ref, pe_out_ref = refs[-2], refs[-1]

        # GNN stack stand-in: per-layer linear (bf16 MXU operands, f32 accumulate)
        # + f32 bias-add / ReLU between layers.  Intermediates stay on-chip.
        h = x_ref[...].astype(jnp.float32)
        for l in range(num_layer):
            w_ref, b_ref = layer_refs[2 * l], layer_refs[2 * l + 1]
            h = jnp.dot(h.astype(jnp.bfloat16), w_ref[...],
                        preferred_element_type=jnp.float32)
            h = h + b_ref[...]
            if l != num_layer - 1:
                h = jnp.maximum(h, 0.0)  # TODO(synk): stand-in for gnn_activation
        h_out_ref[...] = h.astype(h_out_ref.dtype)

        # PEG stand-in: single linear on the positional encoding.
        pe = jnp.dot(pe_ref[...].astype(jnp.bfloat16), wpe_ref[...],
                     preferred_element_type=jnp.float32) + bpe_ref[...]
        pe_out_ref[...] = pe.astype(pe_out_ref.dtype)

    return kernel


def fused_graph_encoder(x, PE, layer_ws, layer_bs, wpe, bpe, *, max_row_tile=512):
    """Fused encoder: x:[N,feat], PE:[N,pe_dim] -> (h:[N,dims[-1]], pe:[N,pe_out]).

    Pads feature dims to multiples of 128 (lane-dense stores) and rows to a
    multiple of the row tile; slices padding off afterwards (zero padding is
    exact: padded weight rows are zero and padded node rows are discarded).
    """
    N, feat_dim = x.shape
    pe_in = PE.shape[1]
    pe_out = wpe.shape[1]
    num_layer = len(layer_ws)

    dims = [feat_dim] + [w.shape[1] for w in layer_ws]
    p_dims = [_round_up(d, 128) for d in dims]
    pe_in_p = _round_up(pe_in, 128)
    pe_out_p = _round_up(pe_out, 128)

    tm = _choose_row_tile(N, max_row_tile)
    Np = _round_up(N, tm)
    grid = (Np // tm,)

    def pad2(a, rows, cols, dtype=None):
        a = jnp.pad(a, ((0, rows - a.shape[0]), (0, cols - a.shape[1])))
        return a if dtype is None else a.astype(dtype)

    x_p = pad2(x, Np, p_dims[0])
    pe_p = pad2(PE, Np, pe_in_p)
    # Weights in bf16 (MXU-native on all gens, half the DMA / resident VMEM);
    # biases stay f32 so bias-add / ReLU run on the f32 VALU path (v5e-safe).
    ws_p = [pad2(w, p_dims[i], p_dims[i + 1], jnp.bfloat16)
            for i, w in enumerate(layer_ws)]
    bs_p = [pad2(b, 1, p_dims[i + 1], jnp.float32) for i, b in enumerate(layer_bs)]
    wpe_p = pad2(wpe, pe_in_p, pe_out_p, jnp.bfloat16)
    bpe_p = pad2(bpe, 1, pe_out_p, jnp.float32)

    # TODO(synk): if downstream tolerates bf16 activations, emit outputs in bf16
    # to halve writeback bytes (keep f32 here so numerics match the f32 inputs).
    out_shape = (
        jax.ShapeDtypeStruct((Np, p_dims[-1]), x.dtype),
        jax.ShapeDtypeStruct((Np, pe_out_p), PE.dtype),
    )
    out_specs = (
        pl.BlockSpec((tm, p_dims[-1]), lambda i: (i, 0)),
        pl.BlockSpec((tm, pe_out_p), lambda i: (i, 0)),
    )

    # Advisory cost estimate for the XLA scheduler.
    flops = 2 * Np * (sum(p_dims[i] * p_dims[i + 1] for i in range(num_layer))
                      + pe_in_p * pe_out_p)
    bytes_accessed = (4 * (int(x_p.size) + int(pe_p.size)
                           + sum(int(b.size) for b in bs_p) + int(bpe_p.size)
                           + Np * p_dims[-1] + Np * pe_out_p)
                      + 2 * (sum(int(w.size) for w in ws_p) + int(wpe_p.size)))

    operands = (x_p, pe_p, *[t for pair in zip(ws_p, bs_p) for t in pair],
                wpe_p, bpe_p)

    def launch(single_buffer_weights):
        def resident(shape):
            # Constant blocks (index_map -> (0,0) every step): no prefetch needed,
            # single buffering halves resident-weight VMEM (critical on v7x 64 MiB).
            if single_buffer_weights:
                return pl.BlockSpec(shape, lambda i: (0, 0),
                                    pipeline_mode=pl.Buffered(1))
            return pl.BlockSpec(shape, lambda i: (0, 0))

        in_specs = [
            pl.BlockSpec((tm, p_dims[0]), lambda i: (i, 0)),
            pl.BlockSpec((tm, pe_in_p), lambda i: (i, 0)),
        ]
        for l in range(num_layer):
            in_specs.append(resident((p_dims[l], p_dims[l + 1])))
            in_specs.append(resident((1, p_dims[l + 1])))
        in_specs.append(resident((pe_in_p, pe_out_p)))
        in_specs.append(resident((1, pe_out_p)))

        return pl.pallas_call(
            _make_fused_encoder_kernel(num_layer),
            out_shape=out_shape,
            grid=grid,
            in_specs=in_specs,
            out_specs=out_specs,
            compiler_params=pltpu.CompilerParams(
                dimension_semantics=("parallel",),  # row tiles independent
                vmem_limit_bytes=_vmem_limit_bytes(),
            ),
            cost_estimate=pl.CostEstimate(
                flops=flops, transcendentals=0, bytes_accessed=bytes_accessed),
        )(*operands)

    # TODO(synk): if the padded bf16 weights approach ~24 MiB (v7x budget), switch
    # to a streamed K/N grid axis with a VMEM accumulator instead of full residency.
    try:
        h_p, pe_padded = launch(True)
    except Exception:
        # pipeline_mode=pl.Buffered(1) unavailable on this jax version: fall back
        # to default double-buffered resident weights (previously validated path).
        h_p, pe_padded = launch(False)

    return h_p[:N, :dims[-1]], pe_padded[:N, :pe_out]


class GraphEncoderPallas:
    """Pallas port of GraphEncoder (embed + forward) with deterministic stand-ins."""

    def __init__(self, feat_dim, embed_dim, out_dim, heads, num_layer, pe_dim, key):
        self.num_layer = num_layer
        # Multi-layer case: every GAT layer outputs hid_dim*heads == embed_dim.
        if num_layer == 1:
            dims = [feat_dim, out_dim]
        else:
            dims = [feat_dim] + [embed_dim] * num_layer
        keys = jax.random.split(key, 2 * num_layer + 2)
        self.ws, self.bs = [], []
        for l in range(num_layer):
            kw, kb = keys[2 * l], keys[2 * l + 1]
            self.ws.append(jax.random.normal(kw, (dims[l], dims[l + 1]), jnp.float32)
                           * (1.0 / float(dims[l]) ** 0.5))
            self.bs.append(jax.random.normal(kb, (1, dims[l + 1]), jnp.float32) * 0.01)
        self.wpe = (jax.random.normal(keys[-2], (pe_dim, pe_dim), jnp.float32)
                    * (1.0 / float(pe_dim) ** 0.5))
        self.bpe = jax.random.normal(keys[-1], (1, pe_dim), jnp.float32) * 0.01

    def embed(self, x, edge_index, PE=None):
        # TODO(synk): edge_index is unused — real GATConv message passing is an
        # external module replaced by the deterministic linear stack above.
        # F.dropout is identity at inference.
        return fused_graph_encoder(x, PE, self.ws, self.bs, self.wpe, self.bpe)

    def __call__(self, x, x_masked, edge_index, PE=None, PE_noise=None):
        # forward() returns (h from the masked path, pe from the noise path).
        # With the deterministic linear stand-ins the h path depends only on
        # x_masked and the pe path only on PE_noise, so a SINGLE fused launch
        # produces both outputs (previously two launches, half discarded).
        return fused_graph_encoder(x_masked, PE_noise, self.ws, self.bs,
                                   self.wpe, self.bpe)


if __name__ == "__main__":
    key = jax.random.PRNGKey(0)
    k_x, k_xm, k_pe, k_pen, k_enc = jax.random.split(key, 5)

    # Small graph consistent with the module: N=8 nodes, feat_dim=16,
    # embed_dim=32, heads=4 (hid_dim=8), enc_gnn_layer=2, PE dim=8.
    N, feat_dim, embed_dim, out_dim, heads, num_layer, pe_dim = 8, 16, 32, 32, 4, 2, 8
    x = jax.random.normal(k_x, (N, feat_dim), jnp.float32)
    x_masked = jax.random.normal(k_xm, (N, feat_dim), jnp.float32)
    PE = jax.random.normal(k_pe, (N, pe_dim), jnp.float32)
    PE_noise = jax.random.normal(k_pen, (N, pe_dim), jnp.float32)
    edge_index = jnp.array([[0, 1, 2, 3, 4, 5, 6, 7],
                            [1, 2, 3, 4, 5, 6, 7, 0]], dtype=jnp.int32)

    enc = GraphEncoderPallas(feat_dim, embed_dim, out_dim, heads, num_layer,
                             pe_dim, k_enc)

    # embed path
    h, pe = enc.embed(x, edge_index, PE=PE)
    jax.block_until_ready((h, pe))

    # forward path (single fused launch)
    h_m, pe_n = enc(x, x_masked, edge_index, PE=PE, PE_noise=PE_noise)
    jax.block_until_ready((h_m, pe_n))

    # Plain-JAX reference mirroring the kernel's bf16-operand / f32-accumulate math.
    def ref_encoder(xin, pein):
        hr = xin.astype(jnp.float32)
        for l in range(num_layer):
            hr = jnp.dot(hr.astype(jnp.bfloat16), enc.ws[l].astype(jnp.bfloat16),
                         preferred_element_type=jnp.float32) + enc.bs[l]
            if l != num_layer - 1:
                hr = jnp.maximum(hr, 0.0)
        per = jnp.dot(pein.astype(jnp.bfloat16), enc.wpe.astype(jnp.bfloat16),
                      preferred_element_type=jnp.float32) + enc.bpe
        return hr, per

    h_ref, pe_ref = ref_encoder(x, PE)
    hm_ref, pen_ref = ref_encoder(x_masked, PE_noise)

    assert h.shape == (N, embed_dim) and pe.shape == (N, pe_dim)
    assert jnp.allclose(h, h_ref, atol=5e-3, rtol=5e-3), "embed h mismatch"
    assert jnp.allclose(pe, pe_ref, atol=5e-3, rtol=5e-3), "embed pe mismatch"
    assert jnp.allclose(h_m, hm_ref, atol=5e-3, rtol=5e-3), "forward h_masked mismatch"
    assert jnp.allclose(pe_n, pen_ref, atol=5e-3, rtol=5e-3), "forward pe_noise mismatch"

    print("KERNEL_OK")
</pallas_src>

<mosaic_0001>
module attributes {stable_mosaic.version = 11 : i64} {
  func.func @kernel(%arg0: i32, %arg1: memref<8x128xf32, #tpu.memory_space<vmem>>, %arg2: memref<8x128xf32, #tpu.memory_space<vmem>>, %arg3: memref<128x128xbf16, #tpu.memory_space<vmem>>, %arg4: memref<1x128xf32, #tpu.memory_space<vmem>>, %arg5: memref<128x128xbf16, #tpu.memory_space<vmem>>, %arg6: memref<1x128xf32, #tpu.memory_space<vmem>>, %arg7: memref<128x128xbf16, #tpu.memory_space<vmem>>, %arg8: memref<1x128xf32, #tpu.memory_space<vmem>>, %arg9: memref<8x128xf32, #tpu.memory_space<vmem>>, %arg10: memref<8x128xf32, #tpu.memory_space<vmem>>) attributes {dimension_semantics = [#tpu.dimension_semantics<parallel>], iteration_bounds = array<i64: 1>, scalar_prefetch = 0 : i64, scratch_operands = 0 : i64, tpu.core_type = #tpu.core_type<tc>, window_params = [{transform_indices = @transform_0, window_bounds = array<i64: 8, 128>}, {transform_indices = @transform_1, window_bounds = array<i64: 8, 128>}, {pipeline_mode = #tpu.pipeline_mode<synchronous>, transform_indices = @transform_2, window_bounds = array<i64: 128, 128>}, {pipeline_mode = #tpu.pipeline_mode<synchronous>, transform_indices = @transform_3, window_bounds = array<i64: 1, 128>}, {pipeline_mode = #tpu.pipeline_mode<synchronous>, transform_indices = @transform_4, window_bounds = array<i64: 128, 128>}, {pipeline_mode = #tpu.pipeline_mode<synchronous>, transform_indices = @transform_5, window_bounds = array<i64: 1, 128>}, {pipeline_mode = #tpu.pipeline_mode<synchronous>, transform_indices = @transform_6, window_bounds = array<i64: 128, 128>}, {pipeline_mode = #tpu.pipeline_mode<synchronous>, transform_indices = @transform_7, window_bounds = array<i64: 1, 128>}, {transform_indices = @transform_8, window_bounds = array<i64: 8, 128>}, {transform_indices = @transform_9, window_bounds = array<i64: 8, 128>}]} {
    %c0 = arith.constant 0 : index
    %c0_0 = arith.constant 0 : index
    %0 = vector.load %arg1[%c0, %c0_0] : memref<8x128xf32, #tpu.memory_space<vmem>>, vector<8x128xf32>
    %1 = arith.truncf %0 : vector<8x128xf32> to vector<8x128xbf16>
    %c0_1 = arith.constant 0 : index
    %c0_2 = arith.constant 0 : index
    %2 = vector.load %arg3[%c0_1, %c0_2] : memref<128x128xbf16, #tpu.memory_space<vmem>>, vector<128x128xbf16>
    %cst = arith.constant dense<0.000000e+00> : vector<8x128xf32>
    %3 = tpu.matmul %1, %2, %cst {dimension_numbers = #tpu.dot_dimension_numbers<[1], [0], [0], [1], [0, 0, 1, 1], [], []>} : vector<8x128xbf16>, vector<128x128xbf16>, vector<8x128xf32> -> vector<8x128xf32>
    %c0_3 = arith.constant 0 : index
    %c0_4 = arith.constant 0 : index
    %4 = vector.load %arg4[%c0_3, %c0_4] : memref<1x128xf32, #tpu.memory_space<vmem>>, vector<1x128xf32>
    %5 = vector.broadcast %4 : vector<1x128xf32> to vector<8x128xf32>
    %6 = arith.addf %3, %5 : vector<8x128xf32>
    %cst_5 = arith.constant 0.000000e+00 : f32
    %7 = vector.broadcast %cst_5 : f32 to vector<8x128xf32>
    %8 = arith.maximumf %6, %7 : vector<8x128xf32>
    %9 = arith.truncf %8 : vector<8x128xf32> to vector<8x128xbf16>
    %c0_6 = arith.constant 0 : index
    %c0_7 = arith.constant 0 : index
    %10 = vector.load %arg5[%c0_6, %c0_7] : memref<128x128xbf16, #tpu.memory_space<vmem>>, vector<128x128xbf16>
    %cst_8 = arith.constant dense<0.000000e+00> : vector<8x128xf32>
    %11 = tpu.matmul %9, %10, %cst_8 {dimension_numbers = #tpu.dot_dimension_numbers<[1], [0], [0], [1], [0, 0, 1, 1], [], []>} : vector<8x128xbf16>, vector<128x128xbf16>, vector<8x128xf32> -> vector<8x128xf32>
    %c0_9 = arith.constant 0 : index
    %c0_10 = arith.constant 0 : index
    %12 = vector.load %arg6[%c0_9, %c0_10] : memref<1x128xf32, #tpu.memory_space<vmem>>, vector<1x128xf32>
    %13 = vector.broadcast %12 : vector<1x128xf32> to vector<8x128xf32>
    %14 = arith.addf %11, %13 : vector<8x128xf32>
    %c0_11 = arith.constant 0 : index
    %c0_12 = arith.constant 0 : index
    %15 = vector.load %arg9[%c0_11, %c0_12] : memref<8x128xf32, #tpu.memory_space<vmem>>, vector<8x128xf32>
    tpu.vector_store %arg9[%c0_11, %c0_12], %14 {strides = array<i32>} : memref<8x128xf32, #tpu.memory_space<vmem>>, vector<8x128xf32>,
    %c0_13 = arith.constant 0 : index
    %c0_14 = arith.constant 0 : index
    %16 = vector.load %arg2[%c0_13, %c0_14] : memref<8x128xf32, #tpu.memory_space<vmem>>, vector<8x128xf32>
    %17 = arith.truncf %16 : vector<8x128xf32> to vector<8x128xbf16>
    %c0_15 = arith.constant 0 : index
    %c0_16 = arith.constant 0 : index
    %18 = vector.load %arg7[%c0_15, %c0_16] : memref<128x128xbf16, #tpu.memory_space<vmem>>, vector<128x128xbf16>
    %cst_17 = arith.constant dense<0.000000e+00> : vector<8x128xf32>
    %19 = tpu.matmul %17, %18, %cst_17 {dimension_numbers = #tpu.dot_dimension_numbers<[1], [0], [0], [1], [0, 0, 1, 1], [], []>} : vector<8x128xbf16>, vector<128x128xbf16>, vector<8x128xf32> -> vector<8x128xf32>
    %c0_18 = arith.constant 0 : index
    %c0_19 = arith.constant 0 : index
    %20 = vector.load %arg8[%c0_18, %c0_19] : memref<1x128xf32, #tpu.memory_space<vmem>>, vector<1x128xf32>
    %21 = vector.broadcast %20 : vector<1x128xf32> to vector<8x128xf32>
    %22 = arith.addf %19, %21 : vector<8x128xf32>
    %c0_20 = arith.constant 0 : index
    %c0_21 = arith.constant 0 : index
    %23 = vector.load %arg10[%c0_20, %c0_21] : memref<8x128xf32, #tpu.memory_space<vmem>>, vector<8x128xf32>
    tpu.vector_store %arg10[%c0_20, %c0_21], %22 {strides = array<i32>} : memref<8x128xf32, #tpu.memory_space<vmem>>, vector<8x128xf32>,
    return
  }
  func.func @transform_0(%arg0: i32) -> (i32, i32) {
    %c0_i32 = arith.constant 0 : i32
    %c0_i32_0 = arith.constant 0 : i32
    return %arg0, %c0_i32 : i32, i32
  }
  func.func @transform_1(%arg0: i32) -> (i32, i32) {
    %c0_i32 = arith.constant 0 : i32
    %c0_i32_0 = arith.constant 0 : i32
    return %arg0, %c0_i32 : i32, i32
  }
  func.func @transform_2(%arg0: i32) -> (i32, i32) {
    %c0_i32 = arith.constant 0 : i32
    %c0_i32_0 = arith.constant 0 : i32
    %c0_i32_1 = arith.constant 0 : i32
    return %c0_i32, %c0_i32_0 : i32, i32
  }
  func.func @transform_3(%arg0: i32) -> (i32, i32) {
    %c0_i32 = arith.constant 0 : i32
    %c0_i32_0 = arith.constant 0 : i32
    %c0_i32_1 = arith.constant 0 : i32
    return %c0_i32, %c0_i32_0 : i32, i32
  }
  func.func @transform_4(%arg0: i32) -> (i32, i32) {
    %c0_i32 = arith.constant 0 : i32
    %c0_i32_0 = arith.constant 0 : i32
    %c0_i32_1 = arith.constant 0 : i32
    return %c0_i32, %c0_i32_0 : i32, i32
  }
  func.func @transform_5(%arg0: i32) -> (i32, i32) {
    %c0_i32 = arith.constant 0 : i32
    %c0_i32_0 = arith.constant 0 : i32
    %c0_i32_1 = arith.constant 0 : i32
    return %c0_i32, %c0_i32_0 : i32, i32
  }
  func.func @transform_6(%arg0: i32) -> (i32, i32) {
    %c0_i32 = arith.constant 0 : i32
    %c0_i32_0 = arith.constant 0 : i32
    %c0_i32_1 = arith.constant 0 : i32
    return %c0_i32, %c0_i32_0 : i32, i32
  }
  func.func @transform_7(%arg0: i32) -> (i32, i32) {
    %c0_i32 = arith.constant 0 : i32
    %c0_i32_0 = arith.constant 0 : i32
    %c0_i32_1 = arith.constant 0 : i32
    return %c0_i32, %c0_i32_0 : i32, i32
  }
  func.func @transform_8(%arg0: i32) -> (i32, i32) {
    %c0_i32 = arith.constant 0 : i32
    %c0_i32_0 = arith.constant 0 : i32
    return %arg0, %c0_i32 : i32, i32
  }
  func.func @transform_9(%arg0: i32) -> (i32, i32) {
    %c0_i32 = arith.constant 0 : i32
    %c0_i32_0 = arith.constant 0 : i32
    return %arg0, %c0_i32 : i32, i32
  }
}

module attributes {stable_mosaic.version = 11 : i64} {
  func.func @kernel(%arg0: i32, %arg1: memref<8x128xf32, #tpu.memory_space<vmem>>, %arg2: memref<8x128xf32, #tpu.memory_space<vmem>>, %arg3: memref<128x128xbf16, #tpu.memory_space<vmem>>, %arg4: memref<1x128xf32, #tpu.memory_space<vmem>>, %arg5: memref<128x128xbf16, #tpu.memory_space<vmem>>, %arg6: memref<1x128xf32, #tpu.memory_space<vmem>>, %arg7: memref<128x128xbf16, #tpu.memory_space<vmem>>, %arg8: memref<1x128xf32, #tpu.memory_space<vmem>>, %arg9: memref<8x128xf32, #tpu.memory_space<vmem>>, %arg10: memref<8x128xf32, #tpu.memory_space<vmem>>) attributes {dimension_semantics = [#tpu.dimension_semantics<parallel>], iteration_bounds = array<i64: 1>, scalar_prefetch = 0 : i64, scratch_operands = 0 : i64, tpu.core_type = #tpu.core_type<tc>, window_params = [{transform_indices = @transform_0, window_bounds = array<i64: 8, 128>}, {transform_indices = @transform_1, window_bounds = array<i64: 8, 128>}, {pipeline_mode = #tpu.pipeline_mode<synchronous>, transform_indices = @transform_2, window_bounds = array<i64: 128, 128>}, {pipeline_mode = #tpu.pipeline_mode<synchronous>, transform_indices = @transform_3, window_bounds = array<i64: 1, 128>}, {pipeline_mode = #tpu.pipeline_mode<synchronous>, transform_indices = @transform_4, window_bounds = array<i64: 128, 128>}, {pipeline_mode = #tpu.pipeline_mode<synchronous>, transform_indices = @transform_5, window_bounds = array<i64: 1, 128>}, {pipeline_mode = #tpu.pipeline_mode<synchronous>, transform_indices = @transform_6, window_bounds = array<i64: 128, 128>}, {pipeline_mode = #tpu.pipeline_mode<synchronous>, transform_indices = @transform_7, window_bounds = array<i64: 1, 128>}, {transform_indices = @transform_8, window_bounds = array<i64: 8, 128>}, {transform_indices = @transform_9, window_bounds = array<i64: 8, 128>}]} {
    %c0 = arith.constant 0 : index
    %c0_0 = arith.constant 0 : index
    %0 = vector.load %arg1[%c0, %c0_0] : memref<8x128xf32, #tpu.memory_space<vmem>>, vector<8x128xf32>
    %1 = arith.truncf %0 : vector<8x128xf32> to vector<8x128xbf16>
    %c0_1 = arith.constant 0 : index
    %c0_2 = arith.constant 0 : index
    %2 = vector.load %arg3[%c0_1, %c0_2] : memref<128x128xbf16, #tpu.memory_space<vmem>>, vector<128x128xbf16>
    %cst = arith.constant dense<0.000000e+00> : vector<8x128xf32>
    %3 = tpu.matmul %1, %2, %cst {dimension_numbers = #tpu.dot_dimension_numbers<[1], [0], [0], [1], [0, 0, 1, 1], [], []>} : vector<8x128xbf16>, vector<128x128xbf16>, vector<8x128xf32> -> vector<8x128xf32>
    %c0_3 = arith.constant 0 : index
    %c0_4 = arith.constant 0 : index
    %4 = vector.load %arg4[%c0_3, %c0_4] : memref<1x128xf32, #tpu.memory_space<vmem>>, vector<1x128xf32>
    %5 = vector.broadcast %4 : vector<1x128xf32> to vector<8x128xf32>
    %6 = arith.addf %3, %5 : vector<8x128xf32>
    %cst_5 = arith.constant 0.000000e+00 : f32
    %7 = vector.broadcast %cst_5 : f32 to vector<8x128xf32>
    %8 = arith.maximumf %6, %7 : vector<8x128xf32>
    %9 = arith.truncf %8 : vector<8x128xf32> to vector<8x128xbf16>
    %c0_6 = arith.constant 0 : index
    %c0_7 = arith.constant 0 : index
    %10 = vector.load %arg5[%c0_6, %c0_7] : memref<128x128xbf16, #tpu.memory_space<vmem>>, vector<128x128xbf16>
    %cst_8 = arith.constant dense<0.000000e+00> : vector<8x128xf32>
    %11 = tpu.matmul %9, %10, %cst_8 {dimension_numbers = #tpu.dot_dimension_numbers<[1], [0], [0], [1], [0, 0, 1, 1], [], []>} : vector<8x128xbf16>, vector<128x128xbf16>, vector<8x128xf32> -> vector<8x128xf32>
    %c0_9 = arith.constant 0 : index
    %c0_10 = arith.constant 0 : index
    %12 = vector.load %arg6[%c0_9, %c0_10] : memref<1x128xf32, #tpu.memory_space<vmem>>, vector<1x128xf32>
    %13 = vector.broadcast %12 : vector<1x128xf32> to vector<8x128xf32>
    %14 = arith.addf %11, %13 : vector<8x128xf32>
    %c0_11 = arith.constant 0 : index
    %c0_12 = arith.constant 0 : index
    %15 = vector.load %arg9[%c0_11, %c0_12] : memref<8x128xf32, #tpu.memory_space<vmem>>, vector<8x128xf32>
    tpu.vector_store %arg9[%c0_11, %c0_12], %14 {strides = array<i32>} : memref<8x128xf32, #tpu.memory_space<vmem>>, vector<8x128xf32>,
    %c0_13 = arith.constant 0 : index
    %c0_14 = arith.constant 0 : index
    %16 = vector.load %arg2[%c0_13, %c0_14] : memref<8x128xf32, #tpu.memory_space<vmem>>, vector<8x128xf32>
    %17 = arith.truncf %16 : vector<8x128xf32> to vector<8x128xbf16>
    %c0_15 = arith.constant 0 : index
    %c0_16 = arith.constant 0 : index
    %18 = vector.load %arg7[%c0_15, %c0_16] : memref<128x128xbf16, #tpu.memory_space<vmem>>, vector<128x128xbf16>
    %cst_17 = arith.constant dense<0.000000e+00> : vector<8x128xf32>
    %19 = tpu.matmul %17, %18, %cst_17 {dimension_numbers = #tpu.dot_dimension_numbers<[1], [0], [0], [1], [0, 0, 1, 1], [], []>} : vector<8x128xbf16>, vector<128x128xbf16>, vector<8x128xf32> -> vector<8x128xf32>
    %c0_18 = arith.constant 0 : index
    %c0_19 = arith.constant 0 : index
    %20 = vector.load %arg8[%c0_18, %c0_19] : memref<1x128xf32, #tpu.memory_space<vmem>>, vector<1x128xf32>
    %21 = vector.broadcast %20 : vector<1x128xf32> to vector<8x128xf32>
    %22 = arith.addf %19, %21 : vector<8x128xf32>
    %c0_20 = arith.constant 0 : index
    %c0_21 = arith.constant 0 : index
    %23 = vector.load %arg10[%c0_20, %c0_21] : memref<8x128xf32, #tpu.memory_space<vmem>>, vector<8x128xf32>
    tpu.vector_store %arg10[%c0_20, %c0_21], %22 {strides = array<i32>} : memref<8x128xf32, #tpu.memory_space<vmem>>, vector<8x128xf32>,
    return
  }
  func.func @transform_0(%arg0: i32) -> (i32, i32) {
    %c0_i32 = arith.constant 0 : i32
    %c0_i32_0 = arith.constant 0 : i32
    return %arg0, %c0_i32 : i32, i32
  }
  func.func @transform_1(%arg0: i32) -> (i32, i32) {
    %c0_i32 = arith.constant 0 : i32
    %c0_i32_0 = arith.constant 0 : i32
    return %arg0, %c0_i32 : i32, i32
  }
  func.func @transform_2(%arg0: i32) -> (i32, i32) {
    %c0_i32 = arith.constant 0 : i32
    %c0_i32_0 = arith.constant 0 : i32
    %c0_i32_1 = arith.constant 0 : i32
    return %c0_i32, %c0_i32_0 : i32, i32
  }
  func.func @transform_3(%arg0: i32) -> (i32, i32) {
    %c0_i32 = arith.constant 0 : i32
    %c0_i32_0 = arith.constant 0 : i32
    %c0_i32_1 = arith.constant 0 : i32
    return %c0_i32, %c0_i32_0 : i32, i32
  }
  func.func @transform_4(%arg0: i32) -> (i32, i32) {
    %c0_i32 = arith.constant 0 : i32
    %c0_i32_0 = arith.constant 0 : i32
    %c0_i32_1 = arith.constant 0 : i32
    return %c0_i32, %c0_i32_0 : i32, i32
  }
  func.func @transform_5(%arg0: i32) -> (i32, i32) {
    %c0_i32 = arith.constant 0 : i32
    %c0_i32_0 = arith.constant 0 : i32
    %c0_i32_1 = arith.constant 0 : i32
    return %c0_i32, %c0_i32_0 : i32, i32
  }
  func.func @transform_6(%arg0: i32) -> (i32, i32) {
    %c0_i32 = arith.constant 0 : i32
    %c0_i32_0 = arith.constant 0 : i32
    %c0_i32_1 = arith.constant 0 : i32
    return %c0_i32, %c0_i32_0 : i32, i32
  }
  func.func @transform_7(%arg0: i32) -> (i32, i32) {
    %c0_i32 = arith.constant 0 : i32
    %c0_i32_0 = arith.constant 0 : i32
    %c0_i32_1 = arith.constant 0 : i32
    return %c0_i32, %c0_i32_0 : i32, i32
  }
  func.func @transform_8(%arg0: i32) -> (i32, i32) {
    %c0_i32 = arith.constant 0 : i32
    %c0_i32_0 = arith.constant 0 : i32
    return %arg0, %c0_i32 : i32, i32
  }
  func.func @transform_9(%arg0: i32) -> (i32, i32) {
    %c0_i32 = arith.constant 0 : i32
    %c0_i32_0 = arith.constant 0 : i32
    return %arg0, %c0_i32 : i32, i32
  }
}

</mosaic_0001>

<llo_original>
// kernel: tpu_custom_call.1
$region0: #{tpu_custom_call.1}
  #allocation0 [shape = 'u32[]', space=smem, size = 0x4, offset = 0x4, fixed_abs, tag = 'smem constant byte address 0x4 - core index']
  #allocation1 [shape = 'u32[72,128]{1,0:T(1,128)}', space=vmem, size = 0x9000, scoped, tag = 'internal scratch']
  %s0 = inlined_call_operand.hbm [shape: f32[8,128], index: 0, kind: input, shape index: {}]
  %s1 = inlined_call_operand.hbm [shape: f32[8,128], index: 1, kind: input, shape index: {}]
  %s2 = inlined_call_operand.hbm [shape: bf16[128,128], index: 2, kind: input, shape index: {}]
  %s3 = inlined_call_operand.vmem [shape: f32[1,128], index: 3, kind: input, shape index: {}]
  %s4 = inlined_call_operand.hbm [shape: bf16[128,128], index: 4, kind: input, shape index: {}]
  %s5 = inlined_call_operand.vmem [shape: f32[1,128], index: 5, kind: input, shape index: {}]
  %s6 = inlined_call_operand.hbm [shape: bf16[128,128], index: 6, kind: input, shape index: {}]
  %s7 = inlined_call_operand.vmem [shape: f32[1,128], index: 7, kind: input, shape index: {}]
  %s8 = inlined_call_operand.hbm [shape: f32[8,128], index: 8, kind: output, shape index: {0}]
  %s9 = inlined_call_operand.hbm [shape: f32[8,128], index: 9, kind: output, shape index: {1}]
  %10 = xla_tuple %s8, %s9
  %s11 = sld [smem:[#allocation0]]
  $region70: #{tpu_custom_call.1} parent=0
    _
  %s13 = ssub.s32 1, %s11
  %s14 = scalar_select 0, %s13, %s11
  $region1: #{tpu_custom_call.1} parent=0
    #allocation2 [shape = 'u8[4096]{0}', space=vmem, size = 0x1000, scoped, tag = 'input window, operand 0, single buffered']
    #allocation3 [shape = 's32[1]{0}', space=sflag, size = 0x4, scoped, tag = 'scoped memory for tpu_custom_call.1']
    #allocation4 [shape = 's32[1]{0}', space=sflag, size = 0x4, scoped, tag = 'scoped memory for tpu_custom_call.1']
    #allocation5 [shape = 'u8[4096]{0}', space=vmem, size = 0x1000, scoped, tag = 'input window, operand 1, single buffered']
    #allocation6 [shape = 's32[1]{0}', space=sflag, size = 0x4, scoped, tag = 'scoped memory for tpu_custom_call.1']
    #allocation7 [shape = 'u8[32768]{0}', space=vmem, size = 0x8000, scoped, tag = 'input window, operand 2, single buffered']
    #allocation8 [shape = 'u8[32768]{0}', space=vmem, size = 0x8000, scoped, tag = 'input window, operand 4, single buffered']
    #allocation9 [shape = 's32[1]{0}', space=sflag, size = 0x4, scoped, tag = 'scoped memory for tpu_custom_call.1']
    #allocation10 [shape = 'u8[32768]{0}', space=vmem, size = 0x8000, scoped, tag = 'input window, operand 6, single buffered']
    #allocation11 [shape = 'u8[4096]{0}', space=vmem, size = 0x1000, scoped, tag = 'output window, operand 0, single buffered']
    #allocation12 [shape = 'u8[4096]{0}', space=vmem, size = 0x1000, scoped, tag = 'output window, operand 1, single buffered']
    #allocation13 [shape = 's32[1]{0}', space=sflag, size = 0x4, scoped, tag = 'scoped memory for tpu_custom_call.1']
    %15 = vsyncpa [#allocation3], 0
    %16 = vsyncpa [#allocation6], 0
    %17 = vsyncpa [#allocation9], 0
    %18 = vsyncpa [#allocation4], 0
    %19 = vsyncpa [#allocation13], 0
    // Predicated region
    $region2: #{tpu_custom_call.1} parent=1 // pred_check
      _
    $region3: #{tpu_custom_call.1} parent=1 // pred_check_branch
      %21 = sbr.rel (0) target = $region5
    $region4: #{tpu_custom_call.1} parent=1 // pred_region
      %23 = vsyncadd [#allocation3], 0
      %s25 = sshll.u32 %s0, 4
      %s26 = int_to_ptr.hbm [resolvable:$true] %s25
      %s27 = sshll.u32 [#allocation2], 4
      %s28 = int_to_ptr.vmem [resolvable:$true] %s27
      %30 = dma.hbm_to_vmem [thread:$0]  %s26, 128, %s28, [#allocation3]
    $region5: #{tpu_custom_call.1} parent=1 // pred_fallthru
      _
    // Predicated region
    $region6: #{tpu_custom_call.1} parent=1 // pred_check
      _
    $region7: #{tpu_custom_call.1} parent=1 // pred_check_branch
      %32 = sbr.rel (0) target = $region9
    $region8: #{tpu_custom_call.1} parent=1 // pred_region
      %34 = vsyncadd [#allocation6], 0
      %s36 = sshll.u32 %s1, 4
      %s37 = int_to_ptr.hbm [resolvable:$true] %s36
      %s38 = sshll.u32 [#allocation5], 4
      %s39 = int_to_ptr.vmem [resolvable:$true] %s38
      %41 = dma.hbm_to_vmem [thread:$0]  %s37, 128, %s39, [#allocation6]
    $region9: #{tpu_custom_call.1} parent=1 // pred_fallthru
      _
    // Predicated region
    $region10: #{tpu_custom_call.1} parent=1 // pred_check
      _
    $region11: #{tpu_custom_call.1} parent=1 // pred_check_branch
      %43 = sbr.rel (0) target = $region13
    $region12: #{tpu_custom_call.1} parent=1 // pred_region
      %45 = vsyncadd [#allocation6], 0
      %s46 = sshll.u32 %s2, 4
      %s47 = int_to_ptr.hbm [resolvable:$true] %s46
      %s48 = sshll.u32 [#allocation7], 4
      %s49 = int_to_ptr.vmem [resolvable:$true] %s48
      %54 = dma.hbm_to_vmem [thread:$0]  %s47, 1024, %s49, [#allocation6], 64, 64, 4
    $region13: #{tpu_custom_call.1} parent=1 // pred_fallthru
      _
    // Predicated region
    $region14: #{tpu_custom_call.1} parent=1 // pred_check
      _
    $region15: #{tpu_custom_call.1} parent=1 // pred_check_branch
      %56 = sbr.rel (0) target = $region17
    $region16: #{tpu_custom_call.1} parent=1 // pred_region
      _
    $region17: #{tpu_custom_call.1} parent=1 // pred_fallthru
      _
    // Predicated region
    $region18: #{tpu_custom_call.1} parent=1 // pred_check
      _
    $region19: #{tpu_custom_call.1} parent=1 // pred_check_branch
      %58 = sbr.rel (0) target = $region21
    $region20: #{tpu_custom_call.1} parent=1 // pred_region
      %60 = vsyncadd [#allocation9], 0
      %s61 = sshll.u32 %s4, 4
      %s62 = int_to_ptr.hbm [resolvable:$true] %s61
      %s63 = sshll.u32 [#allocation8], 4
      %s64 = int_to_ptr.vmem [resolvable:$true] %s63
      %69 = dma.hbm_to_vmem [thread:$0]  %s62, 1024, %s64, [#allocation9], 64, 64, 4
    $region21: #{tpu_custom_call.1} parent=1 // pred_fallthru
      _
    // Predicated region
    $region22: #{tpu_custom_call.1} parent=1 // pred_check
      _
    $region23: #{tpu_custom_call.1} parent=1 // pred_check_branch
      %71 = sbr.rel (0) target = $region25
    $region24: #{tpu_custom_call.1} parent=1 // pred_region
      _
    $region25: #{tpu_custom_call.1} parent=1 // pred_fallthru
      _
    // Predicated region
    $region26: #{tpu_custom_call.1} parent=1 // pred_check
      _
    $region27: #{tpu_custom_call.1} parent=1 // pred_check_branch
      %73 = sbr.rel (0) target = $region29
    $region28: #{tpu_custom_call.1} parent=1 // pred_region
      %75 = vsyncadd [#allocation9], 0
      %s76 = sshll.u32 %s6, 4
      %s77 = int_to_ptr.hbm [resolvable:$true] %s76
      %s78 = sshll.u32 [#allocation10], 4
      %s79 = int_to_ptr.vmem [resolvable:$true] %s78
      %84 = dma.hbm_to_vmem [thread:$0]  %s77, 1024, %s79, [#allocation9], 64, 64, 4
    $region29: #{tpu_custom_call.1} parent=1 // pred_fallthru
      _
    // Predicated region
    $region30: #{tpu_custom_call.1} parent=1 // pred_check
      _
    $region31: #{tpu_custom_call.1} parent=1 // pred_check_branch
      %86 = sbr.rel (0) target = $region33
    $region32: #{tpu_custom_call.1} parent=1 // pred_region
      _
    $region33: #{tpu_custom_call.1} parent=1 // pred_fallthru
      _
    // Predicated region
    $region34: #{tpu_custom_call.1} parent=1 // pred_check
      _
    $region35: #{tpu_custom_call.1} parent=1 // pred_check_branch
      %88 = sbr.rel (0) target = $region37
    $region36: #{tpu_custom_call.1} parent=1 // pred_region
      %90 = dma.done [#allocation3], 128
    $region37: #{tpu_custom_call.1} parent=1 // pred_fallthru
      _
    // Predicated region
    $region38: #{tpu_custom_call.1} parent=1 // pred_check
      _
    $region39: #{tpu_custom_call.1} parent=1 // pred_check_branch
      %92 = sbr.rel (0) target = $region41
    $region40: #{tpu_custom_call.1} parent=1 // pred_region
      %94 = dma.done [#allocation6], 128
    $region41: #{tpu_custom_call.1} parent=1 // pred_fallthru
      _
    // Predicated region
    $region42: #{tpu_custom_call.1} parent=1 // pred_check
      _
    $region43: #{tpu_custom_call.1} parent=1 // pred_check_branch
      %96 = sbr.rel (0) target = $region45
    $region44: #{tpu_custom_call.1} parent=1 // pred_region
      %98 = dma.done [#allocation6], 1024
    $region45: #{tpu_custom_call.1} parent=1 // pred_fallthru
      _
    // Predicated region
    $region46: #{tpu_custom_call.1} parent=1 // pred_check
      _
    $region47: #{tpu_custom_call.1} parent=1 // pred_check_branch
      %100 = sbr.rel (0) target = $region49
    $region48: #{tpu_custom_call.1} parent=1 // pred_region
      %102 = dma.done [#allocation9], 1024
    $region49: #{tpu_custom_call.1} parent=1 // pred_fallthru
      _
    // Predicated region
    $region50: #{tpu_custom_call.1} parent=1 // pred_check
      _
    $region51: #{tpu_custom_call.1} parent=1 // pred_check_branch
      %104 = sbr.rel (0) target = $region53
    $region52: #{tpu_custom_call.1} parent=1 // pred_region
      %106 = dma.done [#allocation9], 1024
    $region53: #{tpu_custom_call.1} parent=1 // pred_fallthru
      _
    %v107 = vld [vmem:[#allocation2] sm:$0xff]
    %v108 = vpack.c.bf16 %v107, %v107
    %v109 = vld [vmem:[#allocation7] sm:$0xf]
    %v110 = vld [vmem:[#allocation7 + $0x4] sm:$0xf]
    %v111 = vld [vmem:[#allocation7 + $0x8] sm:$0xf]
    %v112 = vld [vmem:[#allocation7 + $0xc] sm:$0xf]
    %v113 = vld [vmem:[#allocation7 + $0x10] sm:$0xf]
    %v114 = vld [vmem:[#allocation7 + $0x14] sm:$0xf]
    %v115 = vld [vmem:[#allocation7 + $0x18] sm:$0xf]
    %v116 = vld [vmem:[#allocation7 + $0x1c] sm:$0xf]
    %v117 = vld [vmem:[#allocation7 + $0x20] sm:$0xf]
    %v118 = vld [vmem:[#allocation7 + $0x24] sm:$0xf]
    %v119 = vld [vmem:[#allocation7 + $0x28] sm:$0xf]
    %v120 = vld [vmem:[#allocation7 + $0x2c] sm:$0xf]
    %v121 = vld [vmem:[#allocation7 + $0x30] sm:$0xf]
    %v122 = vld [vmem:[#allocation7 + $0x34] sm:$0xf]
    %v123 = vld [vmem:[#allocation7 + $0x38] sm:$0xf]
    %v124 = vld [vmem:[#allocation7 + $0x3c] sm:$0xf]
    %v125 = vld [vmem:[%s3] sm:$0x1]
    %v127 = vperm.slane %v125, 0
    %v145 = vunpack.c.l.b16 %v109
    %v146 = vunpack.c.l.b16 %v110
    %v147 = vunpack.c.l.b16 %v111
    %v148 = vunpack.c.l.b16 %v112
    %v149 = vunpack.c.l.b16 %v113
    %v150 = vunpack.c.l.b16 %v114
    %v151 = vunpack.c.l.b16 %v115
    %v152 = vunpack.c.l.b16 %v116
    %v153 = vunpack.c.l.b16 %v117
    %v154 = vunpack.c.l.b16 %v118
    %v155 = vunpack.c.l.b16 %v119
    %v156 = vunpack.c.l.b16 %v120
    %v157 = vunpack.c.l.b16 %v121
    %v158 = vunpack.c.l.b16 %v122
    %v159 = vunpack.c.l.b16 %v123
    %v160 = vunpack.c.l.b16 %v124
    %v161 = vpack.c.b16 %v146, %v145
    %v162 = vpack.c.b16 %v148, %v147
    %v163 = vpack.c.b16 %v150, %v149
    %v164 = vpack.c.b16 %v152, %v151
    %v165 = vpack.c.b16 %v154, %v153
    %v166 = vpack.c.b16 %v156, %v155
    %v167 = vpack.c.b16 %v158, %v157
    %v168 = vpack.c.b16 %v160, %v159
    %177 = vmatpush.bf16.msra.mxu0 %v168
    %178 = vmatpush.bf16.msra.mxu0 %v167
    %179 = vmatpush.bf16.msra.mxu0 %v166
    %180 = vmatpush.bf16.msra.mxu0 %v165
    %181 = vmatpush.bf16.msra.mxu0 %v164
    %182 = vmatpush.bf16.msra.mxu0 %v163
    %183 = vmatpush.bf16.msra.mxu0 %v162
    %184 = vmatpush.bf16.msra.mxu0 %v161
    %185 = vmatmul.bf16.gmra.mxu0 %v108
    %v186 = vpop.f32.mrf.mxu0
    %v187 = vadd.f32 %v127, %v186
    %v188 = vpop.f32.mrf.mxu0
    %189 = vdwg.mxu0
    %v190 = vmax.f32 %v187, 0.0
    %v191 = vpack.c.bf16 %v190, %v190
    %v192 = vld [vmem:[#allocation8] sm:$0xf]
    %v193 = vld [vmem:[#allocation8 + $0x4] sm:$0xf]
    %v194 = vld [vmem:[#allocation8 + $0x8] sm:$0xf]
    %v195 = vld [vmem:[#allocation8 + $0xc] sm:$0xf]
    %v196 = vld [vmem:[#allocation8 + $0x10] sm:$0xf]
    %v197 = vld [vmem:[#allocation8 + $0x14] sm:$0xf]
    %v198 = vld [vmem:[#allocation8 + $0x18] sm:$0xf]
    %v199 = vld [vmem:[#allocation8 + $0x1c] sm:$0xf]
    %v200 = vld [vmem:[#allocation8 + $0x20] sm:$0xf]
    %v201 = vld [vmem:[#allocation8 + $0x24] sm:$0xf]
    %v202 = vld [vmem:[#allocation8 + $0x28] sm:$0xf]
    %v203 = vld [vmem:[#allocation8 + $0x2c] sm:$0xf]
    %v204 = vld [vmem:[#allocation8 + $0x30] sm:$0xf]
    %v205 = vld [vmem:[#allocation8 + $0x34] sm:$0xf]
    %v206 = vld [vmem:[#allocation8 + $0x38] sm:$0xf]
    %v207 = vld [vmem:[#allocation8 + $0x3c] sm:$0xf]
    %v208 = vld [vmem:[%s5] sm:$0x1]
    %v210 = vperm.slane %v208, 0
    %v228 = vunpack.c.l.b16 %v192
    %v229 = vunpack.c.l.b16 %v193
    %v230 = vunpack.c.l.b16 %v194
    %v231 = vunpack.c.l.b16 %v195
    %v232 = vunpack.c.l.b16 %v196
    %v233 = vunpack.c.l.b16 %v197
    %v234 = vunpack.c.l.b16 %v198
    %v235 = vunpack.c.l.b16 %v199
    %v236 = vunpack.c.l.b16 %v200
    %v237 = vunpack.c.l.b16 %v201
    %v238 = vunpack.c.l.b16 %v202
    %v239 = vunpack.c.l.b16 %v203
    %v240 = vunpack.c.l.b16 %v204
    %v241 = vunpack.c.l.b16 %v205
    %v242 = vunpack.c.l.b16 %v206
    %v243 = vunpack.c.l.b16 %v207
    %v244 = vpack.c.b16 %v229, %v228
    %v245 = vpack.c.b16 %v231, %v230
    %v246 = vpack.c.b16 %v233, %v232
    %v247 = vpack.c.b16 %v235, %v234
    %v248 = vpack.c.b16 %v237, %v236
    %v249 = vpack.c.b16 %v239, %v238
    %v250 = vpack.c.b16 %v241, %v240
    %v251 = vpack.c.b16 %v243, %v242
    %260 = vmatpush.bf16.msra.mxu0 %v251
    %261 = vmatpush.bf16.msra.mxu0 %v250
    %262 = vmatpush.bf16.msra.mxu0 %v249
    %263 = vmatpush.bf16.msra.mxu0 %v248
    %264 = vmatpush.bf16.msra.mxu0 %v247
    %265 = vmatpush.bf16.msra.mxu0 %v246
    %266 = vmatpush.bf16.msra.mxu0 %v245
    %267 = vmatpush.bf16.msra.mxu0 %v244
    %268 = vmatmul.bf16.gmra.mxu0 %v191
    %v269 = vpop.f32.mrf.mxu0
    %v270 = vadd.f32 %v210, %v269
    %v271 = vpop.f32.mrf.mxu0
    %272 = vdwg.mxu0
    %273 = vst [vmem:[#allocation11] sm:$0xff] %v270
    %v274 = vld [vmem:[#allocation5] sm:$0xff]
    %v275 = vpack.c.bf16 %v274, %v274
    %v276 = vld [vmem:[#allocation10] sm:$0xf]
    %v277 = vld [vmem:[#allocation10 + $0x4] sm:$0xf]
    %v278 = vld [vmem:[#allocation10 + $0x8] sm:$0xf]
    %v279 = vld [vmem:[#allocation10 + $0xc] sm:$0xf]
    %v280 = vld [vmem:[#allocation10 + $0x10] sm:$0xf]
    %v281 = vld [vmem:[#allocation10 + $0x14] sm:$0xf]
    %v282 = vld [vmem:[#allocation10 + $0x18] sm:$0xf]
    %v283 = vld [vmem:[#allocation10 + $0x1c] sm:$0xf]
    %v284 = vld [vmem:[#allocation10 + $0x20] sm:$0xf]
    %v285 = vld [vmem:[#allocation10 + $0x24] sm:$0xf]
    %v286 = vld [vmem:[#allocation10 + $0x28] sm:$0xf]
    %v287 = vld [vmem:[#allocation10 + $0x2c] sm:$0xf]
    %v288 = vld [vmem:[#allocation10 + $0x30] sm:$0xf]
    %v289 = vld [vmem:[#allocation10 + $0x34] sm:$0xf]
    %v290 = vld [vmem:[#allocation10 + $0x38] sm:$0xf]
    %v291 = vld [vmem:[#allocation10 + $0x3c] sm:$0xf]
    %v292 = vld [vmem:[%s7] sm:$0x1]
    %v294 = vperm.slane %v292, 0
    %v312 = vunpack.c.l.b16 %v276
    %v313 = vunpack.c.l.b16 %v277
    %v314 = vunpack.c.l.b16 %v278
    %v315 = vunpack.c.l.b16 %v279
    %v316 = vunpack.c.l.b16 %v280
    %v317 = vunpack.c.l.b16 %v281
    %v318 = vunpack.c.l.b16 %v282
    %v319 = vunpack.c.l.b16 %v283
    %v320 = vunpack.c.l.b16 %v284
    %v321 = vunpack.c.l.b16 %v285
    %v322 = vunpack.c.l.b16 %v286
    %v323 = vunpack.c.l.b16 %v287
    %v324 = vunpack.c.l.b16 %v288
    %v325 = vunpack.c.l.b16 %v289
    %v326 = vunpack.c.l.b16 %v290
    %v327 = vunpack.c.l.b16 %v291
    %v328 = vpack.c.b16 %v313, %v312
    %v329 = vpack.c.b16 %v315, %v314
    %v330 = vpack.c.b16 %v317, %v316
    %v331 = vpack.c.b16 %v319, %v318
    %v332 = vpack.c.b16 %v321, %v320
    %v333 = vpack.c.b16 %v323, %v322
    %v334 = vpack.c.b16 %v325, %v324
    %v335 = vpack.c.b16 %v327, %v326
    %344 = vmatpush.bf16.msra.mxu0 %v335
    %345 = vmatpush.bf16.msra.mxu0 %v334
    %346 = vmatpush.bf16.msra.mxu0 %v333
    %347 = vmatpush.bf16.msra.mxu0 %v332
    %348 = vmatpush.bf16.msra.mxu0 %v331
    %349 = vmatpush.bf16.msra.mxu0 %v330
    %350 = vmatpush.bf16.msra.mxu0 %v329
    %351 = vmatpush.bf16.msra.mxu0 %v328
    %352 = vmatmul.bf16.gmra.mxu0 %v275
    %v353 = vpop.f32.mrf.mxu0
    %v354 = vadd.f32 %v294, %v353
    %v355 = vpop.f32.mrf.mxu0
    %356 = vdwg.mxu0
    %357 = vst [vmem:[#allocation12] sm:$0xff] %v354
    // Predicated region
    $region54: #{tpu_custom_call.1} parent=1 // pred_check
      _
    $region55: #{tpu_custom_call.1} parent=1 // pred_check_branch
      %359 = sbr.rel (0) target = $region57
    $region56: #{tpu_custom_call.1} parent=1 // pred_region
      %361 = vsyncadd [#allocation4], 0
      %s363 = sshll.u32 [#allocation11], 4
      %s364 = int_to_ptr.vmem [resolvable:$true] %s363
      %s365 = sshll.u32 %s8, 4
      %s366 = int_to_ptr.hbm [resolvable:$true] %s365
      %368 = dma.vmem_to_hbm [thread:$0]  %s364, 128, %s366, [#allocation4]
    $region57: #{tpu_custom_call.1} parent=1 // pred_fallthru
      _
    // Predicated region
    $region58: #{tpu_custom_call.1} parent=1 // pred_check
      _
    $region59: #{tpu_custom_call.1} parent=1 // pred_check_branch
      %370 = sbr.rel (0) target = $region61
    $region60: #{tpu_custom_call.1} parent=1 // pred_region
      %372 = vsyncadd [#allocation13], 0
      %s374 = sshll.u32 [#allocation12], 4
      %s375 = int_to_ptr.vmem [resolvable:$true] %s374
      %s376 = sshll.u32 %s9, 4
      %s377 = int_to_ptr.hbm [resolvable:$true] %s376
      %379 = dma.vmem_to_hbm [thread:$0]  %s375, 128, %s377, [#allocation13]
    $region61: #{tpu_custom_call.1} parent=1 // pred_fallthru
      _
    // Predicated region
    $region62: #{tpu_custom_call.1} parent=1 // pred_check
      _
    $region63: #{tpu_custom_call.1} parent=1 // pred_check_branch
      %381 = sbr.rel (0) target = $region65
    $region64: #{tpu_custom_call.1} parent=1 // pred_region
      %383 = dma.done [#allocation4], 128
    $region65: #{tpu_custom_call.1} parent=1 // pred_fallthru
      _
    // Predicated region
    $region66: #{tpu_custom_call.1} parent=1 // pred_check
      _
    $region67: #{tpu_custom_call.1} parent=1 // pred_check_branch
      %385 = sbr.rel (0) target = $region69
    $region68: #{tpu_custom_call.1} parent=1 // pred_region
      %387 = dma.done [#allocation13], 128
    $region69: #{tpu_custom_call.1} parent=1 // pred_fallthru
      _
    %388 = vsyncpa [#allocation3], 1
    %389 = vsyncpa [#allocation6], 1
    %390 = vsyncpa [#allocation9], 1
    %391 = vsyncpa [#allocation4], 1
    %392 = vsyncpa [#allocation13], 1

// kernel: tpu_custom_call.1
$region0: #{tpu_custom_call.1}
  #allocation0 [shape = 'u32[]', space=smem, size = 0x4, offset = 0x4, fixed_abs, tag = 'smem constant byte address 0x4 - core index']
  #allocation1 [shape = 'u32[72,128]{1,0:T(1,128)}', space=vmem, size = 0x9000, scoped, tag = 'internal scratch']
  %s0 = inlined_call_operand.hbm [shape: f32[8,128], index: 0, kind: input, shape index: {}]
  %s1 = inlined_call_operand.hbm [shape: f32[8,128], index: 1, kind: input, shape index: {}]
  %s2 = inlined_call_operand.hbm [shape: bf16[128,128], index: 2, kind: input, shape index: {}]
  %s3 = inlined_call_operand.vmem [shape: f32[1,128], index: 3, kind: input, shape index: {}]
  %s4 = inlined_call_operand.hbm [shape: bf16[128,128], index: 4, kind: input, shape index: {}]
  %s5 = inlined_call_operand.vmem [shape: f32[1,128], index: 5, kind: input, shape index: {}]
  %s6 = inlined_call_operand.hbm [shape: bf16[128,128], index: 6, kind: input, shape index: {}]
  %s7 = inlined_call_operand.vmem [shape: f32[1,128], index: 7, kind: input, shape index: {}]
  %s8 = inlined_call_operand.hbm [shape: f32[8,128], index: 8, kind: output, shape index: {0}]
  %s9 = inlined_call_operand.hbm [shape: f32[8,128], index: 9, kind: output, shape index: {1}]
  %10 = xla_tuple %s8, %s9
  %s11 = sld [smem:[#allocation0]]
  $region70: #{tpu_custom_call.1} parent=0
    _
  %s13 = ssub.s32 1, %s11
  %s14 = scalar_select 0, %s13, %s11
  $region1: #{tpu_custom_call.1} parent=0
    #allocation2 [shape = 'u8[4096]{0}', space=vmem, size = 0x1000, scoped, tag = 'input window, operand 0, single buffered']
    #allocation3 [shape = 's32[1]{0}', space=sflag, size = 0x4, scoped, tag = 'scoped memory for tpu_custom_call.1']
    #allocation4 [shape = 's32[1]{0}', space=sflag, size = 0x4, scoped, tag = 'scoped memory for tpu_custom_call.1']
    #allocation5 [shape = 'u8[4096]{0}', space=vmem, size = 0x1000, scoped, tag = 'input window, operand 1, single buffered']
    #allocation6 [shape = 's32[1]{0}', space=sflag, size = 0x4, scoped, tag = 'scoped memory for tpu_custom_call.1']
    #allocation7 [shape = 'u8[32768]{0}', space=vmem, size = 0x8000, scoped, tag = 'input window, operand 2, single buffered']
    #allocation8 [shape = 'u8[32768]{0}', space=vmem, size = 0x8000, scoped, tag = 'input window, operand 4, single buffered']
    #allocation9 [shape = 's32[1]{0}', space=sflag, size = 0x4, scoped, tag = 'scoped memory for tpu_custom_call.1']
    #allocation10 [shape = 'u8[32768]{0}', space=vmem, size = 0x8000, scoped, tag = 'input window, operand 6, single buffered']
    #allocation11 [shape = 'u8[4096]{0}', space=vmem, size = 0x1000, scoped, tag = 'output window, operand 0, single buffered']
    #allocation12 [shape = 'u8[4096]{0}', space=vmem, size = 0x1000, scoped, tag = 'output window, operand 1, single buffered']
    #allocation13 [shape = 's32[1]{0}', space=sflag, size = 0x4, scoped, tag = 'scoped memory for tpu_custom_call.1']
    %15 = vsyncpa [#allocation3], 0
    %16 = vsyncpa [#allocation6], 0
    %17 = vsyncpa [#allocation9], 0
    %18 = vsyncpa [#allocation4], 0
    %19 = vsyncpa [#allocation13], 0
    // Predicated region
    $region2: #{tpu_custom_call.1} parent=1 // pred_check
      _
    $region3: #{tpu_custom_call.1} parent=1 // pred_check_branch
      %21 = sbr.rel (0) target = $region5
    $region4: #{tpu_custom_call.1} parent=1 // pred_region
      %23 = vsyncadd [#allocation3], 0
      %s25 = sshll.u32 %s0, 4
      %s26 = int_to_ptr.hbm [resolvable:$true] %s25
      %s27 = sshll.u32 [#allocation2], 4
      %s28 = int_to_ptr.vmem [resolvable:$true] %s27
      %30 = dma.hbm_to_vmem [thread:$0]  %s26, 128, %s28, [#allocation3]
    $region5: #{tpu_custom_call.1} parent=1 // pred_fallthru
      _
    // Predicated region
    $region6: #{tpu_custom_call.1} parent=1 // pred_check
      _
    $region7: #{tpu_custom_call.1} parent=1 // pred_check_branch
      %32 = sbr.rel (0) target = $region9
    $region8: #{tpu_custom_call.1} parent=1 // pred_region
      %34 = vsyncadd [#allocation6], 0
      %s36 = sshll.u32 %s1, 4
      %s37 = int_to_ptr.hbm [resolvable:$true] %s36
      %s38 = sshll.u32 [#allocation5], 4
      %s39 = int_to_ptr.vmem [resolvable:$true] %s38
      %41 = dma.hbm_to_vmem [thread:$0]  %s37, 128, %s39, [#allocation6]
    $region9: #{tpu_custom_call.1} parent=1 // pred_fallthru
      _
    // Predicated region
    $region10: #{tpu_custom_call.1} parent=1 // pred_check
      _
    $region11: #{tpu_custom_call.1} parent=1 // pred_check_branch
      %43 = sbr.rel (0) target = $region13
    $region12: #{tpu_custom_call.1} parent=1 // pred_region
      %45 = vsyncadd [#allocation6], 0
      %s46 = sshll.u32 %s2, 4
      %s47 = int_to_ptr.hbm [resolvable:$true] %s46
      %s48 = sshll.u32 [#allocation7], 4
      %s49 = int_to_ptr.vmem [resolvable:$true] %s48
      %54 = dma.hbm_to_vmem [thread:$0]  %s47, 1024, %s49, [#allocation6], 64, 64, 4
    $region13: #{tpu_custom_call.1} parent=1 // pred_fallthru
      _
    // Predicated region
    $region14: #{tpu_custom_call.1} parent=1 // pred_check
      _
    $region15: #{tpu_custom_call.1} parent=1 // pred_check_branch
      %56 = sbr.rel (0) target = $region17
    $region16: #{tpu_custom_call.1} parent=1 // pred_region
      _
    $region17: #{tpu_custom_call.1} parent=1 // pred_fallthru
      _
    // Predicated region
    $region18: #{tpu_custom_call.1} parent=1 // pred_check
      _
    $region19: #{tpu_custom_call.1} parent=1 // pred_check_branch
      %58 = sbr.rel (0) target = $region21
    $region20: #{tpu_custom_call.1} parent=1 // pred_region
      %60 = vsyncadd [#allocation9], 0
      %s61 = sshll.u32 %s4, 4
      %s62 = int_to_ptr.hbm [resolvable:$true] %s61
      %s63 = sshll.u32 [#allocation8], 4
      %s64 = int_to_ptr.vmem [resolvable:$true] %s63
      %69 = dma.hbm_to_vmem [thread:$0]  %s62, 1024, %s64, [#allocation9], 64, 64, 4
    $region21: #{tpu_custom_call.1} parent=1 // pred_fallthru
      _
    // Predicated region
    $region22: #{tpu_custom_call.1} parent=1 // pred_check
      _
    $region23: #{tpu_custom_call.1} parent=1 // pred_check_branch
      %71 = sbr.rel (0) target = $region25
    $region24: #{tpu_custom_call.1} parent=1 // pred_region
      _
    $region25: #{tpu_custom_call.1} parent=1 // pred_fallthru
      _
    // Predicated region
    $region26: #{tpu_custom_call.1} parent=1 // pred_check
      _
    $region27: #{tpu_custom_call.1} parent=1 // pred_check_branch
      %73 = sbr.rel (0) target = $region29
    $region28: #{tpu_custom_call.1} parent=1 // pred_region
      %75 = vsyncadd [#allocation9], 0
      %s76 = sshll.u32 %s6, 4
      %s77 = int_to_ptr.hbm [resolvable:$true] %s76
      %s78 = sshll.u32 [#allocation10], 4
      %s79 = int_to_ptr.vmem [resolvable:$true] %s78
      %84 = dma.hbm_to_vmem [thread:$0]  %s77, 1024, %s79, [#allocation9], 64, 64, 4
    $region29: #{tpu_custom_call.1} parent=1 // pred_fallthru
      _
    // Predicated region
    $region30: #{tpu_custom_call.1} parent=1 // pred_check
      _
    $region31: #{tpu_custom_call.1} parent=1 // pred_check_branch
      %86 = sbr.rel (0) target = $region33
    $region32: #{tpu_custom_call.1} parent=1 // pred_region
      _
    $region33: #{tpu_custom_call.1} parent=1 // pred_fallthru
      _
    // Predicated region
    $region34: #{tpu_custom_call.1} parent=1 // pred_check
      _
    $region35: #{tpu_custom_call.1} parent=1 // pred_check_branch
      %88 = sbr.rel (0) target = $region37
    $region36: #{tpu_custom_call.1} parent=1 // pred_region
      %90 = dma.done [#allocation3], 128
    $region37: #{tpu_custom_call.1} parent=1 // pred_fallthru
      _
    // Predicated region
    $region38: #{tpu_custom_call.1} parent=1 // pred_check
      _
    $region39: #{tpu_custom_call.1} parent=1 // pred_check_branch
      %92 = sbr.rel (0) target = $region41
    $region40: #{tpu_custom_call.1} parent=1 // pred_region
      %94 = dma.done [#allocation6], 128
    $region41: #{tpu_custom_call.1} parent=1 // pred_fallthru
      _
    // Predicated region
    $region42: #{tpu_custom_call.1} parent=1 // pred_check
      _
    $region43: #{tpu_custom_call.1} parent=1 // pred_check_branch
      %96 = sbr.rel (0) target = $region45
    $region44: #{tpu_custom_call.1} parent=1 // pred_region
      %98 = dma.done [#allocation6], 1024
    $region45: #{tpu_custom_call.1} parent=1 // pred_fallthru
      _
    // Predicated region
    $region46: #{tpu_custom_call.1} parent=1 // pred_check
      _
    $region47: #{tpu_custom_call.1} parent=1 // pred_check_branch
      %100 = sbr.rel (0) target = $region49
    $region48: #{tpu_custom_call.1} parent=1 // pred_region
      %102 = dma.done [#allocation9], 1024
    $region49: #{tpu_custom_call.1} parent=1 // pred_fallthru
      _
    // Predicated region
    $region50: #{tpu_custom_call.1} parent=1 // pred_check
      _
    $region51: #{tpu_custom_call.1} parent=1 // pred_check_branch
      %104 = sbr.rel (0) target = $region53
    $region52: #{tpu_custom_call.1} parent=1 // pred_region
      %106 = dma.done [#allocation9], 1024
    $region53: #{tpu_custom_call.1} parent=1 // pred_fallthru
      _
    %v107 = vld [vmem:[#allocation2] sm:$0xff]
    %v108 = vpack.c.bf16 %v107, %v107
    %v109 = vld [vmem:[#allocation7] sm:$0xf]
    %v110 = vld [vmem:[#allocation7 + $0x4] sm:$0xf]
    %v111 = vld [vmem:[#allocation7 + $0x8] sm:$0xf]
    %v112 = vld [vmem:[#allocation7 + $0xc] sm:$0xf]
    %v113 = vld [vmem:[#allocation7 + $0x10] sm:$0xf]
    %v114 = vld [vmem:[#allocation7 + $0x14] sm:$0xf]
    %v115 = vld [vmem:[#allocation7 + $0x18] sm:$0xf]
    %v116 = vld [vmem:[#allocation7 + $0x1c] sm:$0xf]
    %v117 = vld [vmem:[#allocation7 + $0x20] sm:$0xf]
    %v118 = vld [vmem:[#allocation7 + $0x24] sm:$0xf]
    %v119 = vld [vmem:[#allocation7 + $0x28] sm:$0xf]
    %v120 = vld [vmem:[#allocation7 + $0x2c] sm:$0xf]
    %v121 = vld [vmem:[#allocation7 + $0x30] sm:$0xf]
    %v122 = vld [vmem:[#allocation7 + $0x34] sm:$0xf]
    %v123 = vld [vmem:[#allocation7 + $0x38] sm:$0xf]
    %v124 = vld [vmem:[#allocation7 + $0x3c] sm:$0xf]
    %v125 = vld [vmem:[%s3] sm:$0x1]
    %v127 = vperm.slane %v125, 0
    %v145 = vunpack.c.l.b16 %v109
    %v146 = vunpack.c.l.b16 %v110
    %v147 = vunpack.c.l.b16 %v111
    %v148 = vunpack.c.l.b16 %v112
    %v149 = vunpack.c.l.b16 %v113
    %v150 = vunpack.c.l.b16 %v114
    %v151 = vunpack.c.l.b16 %v115
    %v152 = vunpack.c.l.b16 %v116
    %v153 = vunpack.c.l.b16 %v117
    %v154 = vunpack.c.l.b16 %v118
    %v155 = vunpack.c.l.b16 %v119
    %v156 = vunpack.c.l.b16 %v120
    %v157 = vunpack.c.l.b16 %v121
    %v158 = vunpack.c.l.b16 %v122
    %v159 = vunpack.c.l.b16 %v123
    %v160 = vunpack.c.l.b16 %v124
    %v161 = vpack.c.b16 %v146, %v145
    %v162 = vpack.c.b16 %v148, %v147
    %v163 = vpack.c.b16 %v150, %v149
    %v164 = vpack.c.b16 %v152, %v151
    %v165 = vpack.c.b16 %v154, %v153
    %v166 = vpack.c.b16 %v156, %v155
    %v167 = vpack.c.b16 %v158, %v157
    %v168 = vpack.c.b16 %v160, %v159
    %177 = vmatpush.bf16.msra.mxu0 %v168
    %178 = vmatpush.bf16.msra.mxu0 %v167
    %179 = vmatpush.bf16.msra.mxu0 %v166
    %180 = vmatpush.bf16.msra.mxu0 %v165
    %181 = vmatpush.bf16.msra.mxu0 %v164
    %182 = vmatpush.bf16.msra.mxu0 %v163
    %183 = vmatpush.bf16.msra.mxu0 %v162
    %184 = vmatpush.bf16.msra.mxu0 %v161
    %185 = vmatmul.bf16.gmra.mxu0 %v108
    %v186 = vpop.f32.mrf.mxu0
    %v187 = vadd.f32 %v127, %v186
    %v188 = vpop.f32.mrf.mxu0
    %189 = vdwg.mxu0
    %v190 = vmax.f32 %v187, 0.0
    %v191 = vpack.c.bf16 %v190, %v190
    %v192 = vld [vmem:[#allocation8] sm:$0xf]
    %v193 = vld [vmem:[#allocation8 + $0x4] sm:$0xf]
    %v194 = vld [vmem:[#allocation8 + $0x8] sm:$0xf]
    %v195 = vld [vmem:[#allocation8 + $0xc] sm:$0xf]
    %v196 = vld [vmem:[#allocation8 + $0x10] sm:$0xf]
    %v197 = vld [vmem:[#allocation8 + $0x14] sm:$0xf]
    %v198 = vld [vmem:[#allocation8 + $0x18] sm:$0xf]
    %v199 = vld [vmem:[#allocation8 + $0x1c] sm:$0xf]
    %v200 = vld [vmem:[#allocation8 + $0x20] sm:$0xf]
    %v201 = vld [vmem:[#allocation8 + $0x24] sm:$0xf]
    %v202 = vld [vmem:[#allocation8 + $0x28] sm:$0xf]
    %v203 = vld [vmem:[#allocation8 + $0x2c] sm:$0xf]
    %v204 = vld [vmem:[#allocation8 + $0x30] sm:$0xf]
    %v205 = vld [vmem:[#allocation8 + $0x34] sm:$0xf]
    %v206 = vld [vmem:[#allocation8 + $0x38] sm:$0xf]
    %v207 = vld [vmem:[#allocation8 + $0x3c] sm:$0xf]
    %v208 = vld [vmem:[%s5] sm:$0x1]
    %v210 = vperm.slane %v208, 0
    %v228 = vunpack.c.l.b16 %v192
    %v229 = vunpack.c.l.b16 %v193
    %v230 = vunpack.c.l.b16 %v194
    %v231 = vunpack.c.l.b16 %v195
    %v232 = vunpack.c.l.b16 %v196
    %v233 = vunpack.c.l.b16 %v197
    %v234 = vunpack.c.l.b16 %v198
    %v235 = vunpack.c.l.b16 %v199
    %v236 = vunpack.c.l.b16 %v200
    %v237 = vunpack.c.l.b16 %v201
    %v238 = vunpack.c.l.b16 %v202
    %v239 = vunpack.c.l.b16 %v203
    %v240 = vunpack.c.l.b16 %v204
    %v241 = vunpack.c.l.b16 %v205
    %v242 = vunpack.c.l.b16 %v206
    %v243 = vunpack.c.l.b16 %v207
    %v244 = vpack.c.b16 %v229, %v228
    %v245 = vpack.c.b16 %v231, %v230
    %v246 = vpack.c.b16 %v233, %v232
    %v247 = vpack.c.b16 %v235, %v234
    %v248 = vpack.c.b16 %v237, %v236
    %v249 = vpack.c.b16 %v239, %v238
    %v250 = vpack.c.b16 %v241, %v240
    %v251 = vpack.c.b16 %v243, %v242
    %260 = vmatpush.bf16.msra.mxu0 %v251
    %261 = vmatpush.bf16.msra.mxu0 %v250
    %262 = vmatpush.bf16.msra.mxu0 %v249
    %263 = vmatpush.bf16.msra.mxu0 %v248
    %264 = vmatpush.bf16.msra.mxu0 %v247
    %265 = vmatpush.bf16.msra.mxu0 %v246
    %266 = vmatpush.bf16.msra.mxu0 %v245
    %267 = vmatpush.bf16.msra.mxu0 %v244
    %268 = vmatmul.bf16.gmra.mxu0 %v191
    %v269 = vpop.f32.mrf.mxu0
    %v270 = vadd.f32 %v210, %v269
    %v271 = vpop.f32.mrf.mxu0
    %272 = vdwg.mxu0
    %273 = vst [vmem:[#allocation11] sm:$0xff] %v270
    %v274 = vld [vmem:[#allocation5] sm:$0xff]
    %v275 = vpack.c.bf16 %v274, %v274
    %v276 = vld [vmem:[#allocation10] sm:$0xf]
    %v277 = vld [vmem:[#allocation10 + $0x4] sm:$0xf]
    %v278 = vld [vmem:[#allocation10 + $0x8] sm:$0xf]
    %v279 = vld [vmem:[#allocation10 + $0xc] sm:$0xf]
    %v280 = vld [vmem:[#allocation10 + $0x10] sm:$0xf]
    %v281 = vld [vmem:[#allocation10 + $0x14] sm:$0xf]
    %v282 = vld [vmem:[#allocation10 + $0x18] sm:$0xf]
    %v283 = vld [vmem:[#allocation10 + $0x1c] sm:$0xf]
    %v284 = vld [vmem:[#allocation10 + $0x20] sm:$0xf]
    %v285 = vld [vmem:[#allocation10 + $0x24] sm:$0xf]
    %v286 = vld [vmem:[#allocation10 + $0x28] sm:$0xf]
    %v287 = vld [vmem:[#allocation10 + $0x2c] sm:$0xf]
    %v288 = vld [vmem:[#allocation10 + $0x30] sm:$0xf]
    %v289 = vld [vmem:[#allocation10 + $0x34] sm:$0xf]
    %v290 = vld [vmem:[#allocation10 + $0x38] sm:$0xf]
    %v291 = vld [vmem:[#allocation10 + $0x3c] sm:$0xf]
    %v292 = vld [vmem:[%s7] sm:$0x1]
    %v294 = vperm.slane %v292, 0
    %v312 = vunpack.c.l.b16 %v276
    %v313 = vunpack.c.l.b16 %v277
    %v314 = vunpack.c.l.b16 %v278
    %v315 = vunpack.c.l.b16 %v279
    %v316 = vunpack.c.l.b16 %v280
    %v317 = vunpack.c.l.b16 %v281
    %v318 = vunpack.c.l.b16 %v282
    %v319 = vunpack.c.l.b16 %v283
    %v320 = vunpack.c.l.b16 %v284
    %v321 = vunpack.c.l.b16 %v285
    %v322 = vunpack.c.l.b16 %v286
    %v323 = vunpack.c.l.b16 %v287
    %v324 = vunpack.c.l.b16 %v288
    %v325 = vunpack.c.l.b16 %v289
    %v326 = vunpack.c.l.b16 %v290
    %v327 = vunpack.c.l.b16 %v291
    %v328 = vpack.c.b16 %v313, %v312
    %v329 = vpack.c.b16 %v315, %v314
    %v330 = vpack.c.b16 %v317, %v316
    %v331 = vpack.c.b16 %v319, %v318
    %v332 = vpack.c.b16 %v321, %v320
    %v333 = vpack.c.b16 %v323, %v322
    %v334 = vpack.c.b16 %v325, %v324
    %v335 = vpack.c.b16 %v327, %v326
    %344 = vmatpush.bf16.msra.mxu0 %v335
    %345 = vmatpush.bf16.msra.mxu0 %v334
    %346 = vmatpush.bf16.msra.mxu0 %v333
    %347 = vmatpush.bf16.msra.mxu0 %v332
    %348 = vmatpush.bf16.msra.mxu0 %v331
    %349 = vmatpush.bf16.msra.mxu0 %v330
    %350 = vmatpush.bf16.msra.mxu0 %v329
    %351 = vmatpush.bf16.msra.mxu0 %v328
    %352 = vmatmul.bf16.gmra.mxu0 %v275
    %v353 = vpop.f32.mrf.mxu0
    %v354 = vadd.f32 %v294, %v353
    %v355 = vpop.f32.mrf.mxu0
    %356 = vdwg.mxu0
    %357 = vst [vmem:[#allocation12] sm:$0xff] %v354
    // Predicated region
    $region54: #{tpu_custom_call.1} parent=1 // pred_check
      _
    $region55: #{tpu_custom_call.1} parent=1 // pred_check_branch
      %359 = sbr.rel (0) target = $region57
    $region56: #{tpu_custom_call.1} parent=1 // pred_region
      %361 = vsyncadd [#allocation4], 0
      %s363 = sshll.u32 [#allocation11], 4
      %s364 = int_to_ptr.vmem [resolvable:$true] %s363
      %s365 = sshll.u32 %s8, 4
      %s366 = int_to_ptr.hbm [resolvable:$true] %s365
      %368 = dma.vmem_to_hbm [thread:$0]  %s364, 128, %s366, [#allocation4]
    $region57: #{tpu_custom_call.1} parent=1 // pred_fallthru
      _
    // Predicated region
    $region58: #{tpu_custom_call.1} parent=1 // pred_check
      _
    $region59: #{tpu_custom_call.1} parent=1 // pred_check_branch
      %370 = sbr.rel (0) target = $region61
    $region60: #{tpu_custom_call.1} parent=1 // pred_region
      %372 = vsyncadd [#allocation13], 0
      %s374 = sshll.u32 [#allocation12], 4
      %s375 = int_to_ptr.vmem [resolvable:$true] %s374
      %s376 = sshll.u32 %s9, 4
      %s377 = int_to_ptr.hbm [resolvable:$true] %s376
      %379 = dma.vmem_to_hbm [thread:$0]  %s375, 128, %s377, [#allocation13]
    $region61: #{tpu_custom_call.1} parent=1 // pred_fallthru
      _
    // Predicated region
    $region62: #{tpu_custom_call.1} parent=1 // pred_check
      _
    $region63: #{tpu_custom_call.1} parent=1 // pred_check_branch
      %381 = sbr.rel (0) target = $region65
    $region64: #{tpu_custom_call.1} parent=1 // pred_region
      %383 = dma.done [#allocation4], 128
    $region65: #{tpu_custom_call.1} parent=1 // pred_fallthru
      _
    // Predicated region
    $region66: #{tpu_custom_call.1} parent=1 // pred_check
      _
    $region67: #{tpu_custom_call.1} parent=1 // pred_check_branch
      %385 = sbr.rel (0) target = $region69
    $region68: #{tpu_custom_call.1} parent=1 // pred_region
      %387 = dma.done [#allocation13], 128
    $region69: #{tpu_custom_call.1} parent=1 // pred_fallthru
      _
    %388 = vsyncpa [#allocation3], 1
    %389 = vsyncpa [#allocation6], 1
    %390 = vsyncpa [#allocation9], 1
    %391 = vsyncpa [#allocation4], 1
    %392 = vsyncpa [#allocation13], 1

</llo_original>
